<compile_context>
chip_gen: v7x
topology: tpu7x:2x2x1
jax: 0.10.0
libtpu: 0.0.40
codegen_flags: <defaults>
</compile_context>

<pallas_src>
import functools

import jax
import jax.numpy as jnp
from jax.experimental import pallas as pl
from jax.experimental.pallas import tpu as pltpu

# ---- "constants" module stand-ins (deterministic, in-script) ----------------
MODEL_HIDDEN = 128
OUTPUT_DIM = 1
MODEL_DROPOUT = 0.3          # unused at inference (dropout == identity)
BN_EPS = 1e-5


def sepsis_kernel(x_ref, w1_ref, c1_ref, w2_ref, c2_ref, wo_ref, bo_ref, o_ref):
    """One batch tile, fully resident in VMEM, transposed layout.

    x_ref : (D_in, T) bf16   -- batch on lanes (lane-dense)
    w1_ref: (H, D_in) bf16   c1_ref: (H, 1) f32   (BN1 folded in)
    w2_ref: (H, H)   bf16    c2_ref: (H, 1) f32   (BN2 folded in)
    wo_ref: (H, 1)   f32     bo_ref: (1, 1) f32
    o_ref : (1, T)   f32     -- lane-dense output slab
    """
    # fc1 (+ folded bn1) + relu : bf16 MXU matmul, f32 accumulate / elementwise
    h1 = jnp.dot(w1_ref[...], x_ref[...], preferred_element_type=jnp.float32)
    h1 = jnp.maximum(h1 + c1_ref[...], 0.0)                         # (H, T) f32

    # fc2 (+ folded bn2) + relu
    h2 = jnp.dot(w2_ref[...], h1.astype(jnp.bfloat16),
                 preferred_element_type=jnp.float32)
    h2 = jnp.maximum(h2 + c2_ref[...], 0.0)                         # (H, T) f32

    # output projection H -> 1: VPU multiply + sublane reduce (avoids N=1 MXU
    # matmul and keeps the stored block lane-dense).
    o_ref[...] = (jnp.sum(h2 * wo_ref[...], axis=0, keepdims=True)
                  + bo_ref[...]).astype(o_ref.dtype)


def _fold_and_transpose(params):
    """Fold eval-mode BatchNorm1d into the linear layers and transpose weights
    to the (out_features, in_features) layout used by the transposed kernel."""
    def fold(w, b, gamma, beta, mean, var):
        scale = gamma / jnp.sqrt(var + BN_EPS)      # (out,)
        shift = beta - mean * scale                 # (out,)
        w_f = (w * scale[None, :]).T                # (out, in)
        c = (b * scale + shift)[:, None]            # (out, 1)
        return w_f, c

    w1t, c1 = fold(params["w1"], params["b1"], params["bn1_gamma"],
                   params["bn1_beta"], params["bn1_mean"], params["bn1_var"])
    w2t, c2 = fold(params["w2"], params["b2"], params["bn2_gamma"],
                   params["bn2_beta"], params["bn2_mean"], params["bn2_var"])
    wo_col = params["wo"]                           # (H, 1)
    bo = params["bo"].reshape(1, 1)
    return (w1t.astype(jnp.bfloat16), c1.astype(jnp.float32),
            w2t.astype(jnp.bfloat16), c2.astype(jnp.float32),
            wo_col.astype(jnp.float32), bo.astype(jnp.float32))


@functools.partial(jax.jit, static_argnames=("batch_tile",))
def sepsis_forward(x, params, batch_tile=256):
    """Wrapper: folds BN, transposes to lane-dense layout, launches the kernel.

    batch_tile should be a multiple of 256 on v6e/v7x (128 on v5e); keep B big
    enough that the grid has >= 2 steps so v7x shards across both TensorCores.
    """
    B, D_in = x.shape
    H = params["w1"].shape[1]
    O = params["wo"].shape[1]
    assert O == 1, "kernel's final VPU-reduce projection assumes OUTPUT_DIM == 1"

    w1t, c1, w2t, c2, wo_col, bo = _fold_and_transpose(params)
    xT = x.T.astype(jnp.bfloat16)                   # (D_in, B), batch on lanes

    grid = (pl.cdiv(B, batch_tile),)
    rep = lambda r, c_: pl.BlockSpec((r, c_), lambda i: (0, 0))   # replicated

    out_t = pl.pallas_call(
        sepsis_kernel,
        out_shape=jax.ShapeDtypeStruct((1, B), jnp.float32),
        grid_spec=pl.GridSpec(
            grid=grid,
            in_specs=[
                pl.BlockSpec((D_in, batch_tile), lambda i: (0, i)),  # xT tile
                rep(H, D_in),   # w1t (bf16)
                rep(H, 1),      # c1  (f32)
                rep(H, H),      # w2t (bf16)
                rep(H, 1),      # c2  (f32)
                rep(H, 1),      # wo  (f32)
                rep(1, 1),      # bo  (f32)
            ],
            out_specs=pl.BlockSpec((1, batch_tile), lambda i: (0, i)),
        ),
        compiler_params=pltpu.CompilerParams(
            dimension_semantics=("parallel",)),
    )(xT, w1t, c1, w2t, c2, wo_col, bo)

    return out_t.reshape(B, O)                      # back to (B, OUTPUT_DIM)


def reference_forward(x, params):
    """Pure-JAX f32 reference matching the PyTorch eval-mode forward."""
    def bn(h, g, b, m, v):
        return g * (h - m) / jnp.sqrt(v + BN_EPS) + b

    h = x @ params["w1"] + params["b1"]
    h = jnp.maximum(bn(h, params["bn1_gamma"], params["bn1_beta"],
                       params["bn1_mean"], params["bn1_var"]), 0.0)
    h = h @ params["w2"] + params["b2"]
    h = jnp.maximum(bn(h, params["bn2_gamma"], params["bn2_beta"],
                       params["bn2_mean"], params["bn2_var"]), 0.0)
    return h @ params["wo"] + params["bo"]


def reference_forward_bf16(x, params):
    """Same math as the kernel (folded-BN bf16 matmul inputs, f32 accumulate),
    in plain JAX — tight numerical check of the Pallas lowering."""
    w1t, c1, w2t, c2, wo_col, bo = _fold_and_transpose(params)
    xT = x.T.astype(jnp.bfloat16)
    h1 = jnp.maximum(jnp.dot(w1t, xT, preferred_element_type=jnp.float32) + c1, 0.0)
    h2 = jnp.maximum(jnp.dot(w2t, h1.astype(jnp.bfloat16),
                             preferred_element_type=jnp.float32) + c2, 0.0)
    out = jnp.sum(h2 * wo_col, axis=0, keepdims=True) + bo
    return out.reshape(-1, 1)


def init_params(key, input_dim, hidden, out_dim):
    ks = jax.random.split(key, 6)

    def linear_init(k, fan_in, fan_out):
        bound = 1.0 / jnp.sqrt(fan_in)
        kw, kb = jax.random.split(k)
        w = jax.random.uniform(kw, (fan_in, fan_out), jnp.float32, -bound, bound)
        b = jax.random.uniform(kb, (fan_out,), jnp.float32, -bound, bound)
        return w, b

    w1, b1 = linear_init(ks[0], input_dim, hidden)
    w2, b2 = linear_init(ks[1], hidden, hidden)
    wo, bo = linear_init(ks[2], hidden, out_dim)

    # BatchNorm1d params, perturbed deterministically so the fold is exercised.
    bn1_gamma = 1.0 + 0.1 * jax.random.normal(ks[3], (hidden,), jnp.float32)
    bn1_beta = 0.05 * jax.random.normal(ks[4], (hidden,), jnp.float32)
    bn1_mean = 0.02 * jax.random.normal(ks[5], (hidden,), jnp.float32)
    bn1_var = jnp.ones((hidden,), jnp.float32) * 1.1
    bn2_gamma = jnp.ones((hidden,), jnp.float32) * 0.9
    bn2_beta = jnp.ones((hidden,), jnp.float32) * 0.01
    bn2_mean = jnp.zeros((hidden,), jnp.float32)
    bn2_var = jnp.ones((hidden,), jnp.float32)

    return dict(w1=w1, b1=b1, w2=w2, b2=b2, wo=wo, bo=bo,
                bn1_gamma=bn1_gamma, bn1_beta=bn1_beta,
                bn1_mean=bn1_mean, bn1_var=bn1_var,
                bn2_gamma=bn2_gamma, bn2_beta=bn2_beta,
                bn2_mean=bn2_mean, bn2_var=bn2_var)


if __name__ == "__main__":
    key = jax.random.PRNGKey(0)
    k_x, k_p = jax.random.split(key)

    BATCH, INPUT_DIM = 512, 16     # 2 grid steps at batch_tile=256
    x = jax.random.normal(k_x, (BATCH, INPUT_DIM), jnp.float32)
    params = init_params(k_p, INPUT_DIM, MODEL_HIDDEN, OUTPUT_DIM)

    out = sepsis_forward(x, params, batch_tile=256)
    out = jax.block_until_ready(out)
    assert out.shape == (BATCH, OUTPUT_DIM), out.shape

    ref_tight = reference_forward_bf16(x, params)     # same precision recipe
    ref_f32 = reference_forward(x, params)            # true f32 eval-mode ref
    err_tight = float(jnp.max(jnp.abs(out - ref_tight)))
    err_f32 = float(jnp.max(jnp.abs(out - ref_f32)))
    assert err_tight < 2e-3, f"kernel vs bf16-emulated reference: {err_tight}"
    assert err_f32 < 5e-2, f"kernel vs f32 reference (bf16 rounding): {err_f32}"

    print("KERNEL_OK")
</pallas_src>

<mosaic_0001>
module attributes {stable_mosaic.version = 11 : i64} {
  func.func @sepsis_kernel(%arg0: i32, %arg1: memref<16x256xbf16, #tpu.memory_space<vmem>>, %arg2: memref<128x16xbf16, #tpu.memory_space<vmem>>, %arg3: memref<128x1xf32, #tpu.memory_space<vmem>>, %arg4: memref<128x128xbf16, #tpu.memory_space<vmem>>, %arg5: memref<128x1xf32, #tpu.memory_space<vmem>>, %arg6: memref<128x1xf32, #tpu.memory_space<vmem>>, %arg7: memref<1x1xf32, #tpu.memory_space<vmem>>, %arg8: memref<1x256xf32, #tpu.memory_space<vmem>>) attributes {dimension_semantics = [#tpu.dimension_semantics<parallel>], iteration_bounds = array<i64: 2>, scalar_prefetch = 0 : i64, scratch_operands = 0 : i64, tpu.core_type = #tpu.core_type<tc>, window_params = [{transform_indices = @transform_0, window_bounds = array<i64: 16, 256>}, {pipeline_mode = #tpu.pipeline_mode<synchronous>, transform_indices = @transform_1, window_bounds = array<i64: 128, 16>}, {pipeline_mode = #tpu.pipeline_mode<synchronous>, transform_indices = @transform_2, window_bounds = array<i64: 128, 1>}, {pipeline_mode = #tpu.pipeline_mode<synchronous>, transform_indices = @transform_3, window_bounds = array<i64: 128, 128>}, {pipeline_mode = #tpu.pipeline_mode<synchronous>, transform_indices = @transform_4, window_bounds = array<i64: 128, 1>}, {pipeline_mode = #tpu.pipeline_mode<synchronous>, transform_indices = @transform_5, window_bounds = array<i64: 128, 1>}, {pipeline_mode = #tpu.pipeline_mode<synchronous>, transform_indices = @transform_6, window_bounds = array<i64: 1, 1>}, {transform_indices = @transform_7, window_bounds = array<i64: 1, 256>}]} {
    %c0 = arith.constant 0 : index
    %c0_0 = arith.constant 0 : index
    %0 = vector.load %arg2[%c0, %c0_0] : memref<128x16xbf16, #tpu.memory_space<vmem>>, vector<128x16xbf16>
    %c0_1 = arith.constant 0 : index
    %c0_2 = arith.constant 0 : index
    %1 = vector.load %arg1[%c0_1, %c0_2] : memref<16x256xbf16, #tpu.memory_space<vmem>>, vector<16x256xbf16>
    %cst = arith.constant dense<0.000000e+00> : vector<128x256xf32>
    %2 = tpu.matmul %0, %1, %cst {dimension_numbers = #tpu.dot_dimension_numbers<[1], [0], [0], [1], [0, 0, 1, 1], [], []>} : vector<128x16xbf16>, vector<16x256xbf16>, vector<128x256xf32> -> vector<128x256xf32>
    %c0_3 = arith.constant 0 : index
    %c0_4 = arith.constant 0 : index
    %3 = vector.load %arg3[%c0_3, %c0_4] : memref<128x1xf32, #tpu.memory_space<vmem>>, vector<128x1xf32>
    %4 = vector.broadcast %3 : vector<128x1xf32> to vector<128x256xf32>
    %5 = arith.addf %2, %4 : vector<128x256xf32>
    %cst_5 = arith.constant 0.000000e+00 : f32
    %6 = vector.broadcast %cst_5 : f32 to vector<128x256xf32>
    %7 = arith.maximumf %5, %6 : vector<128x256xf32>
    %c0_6 = arith.constant 0 : index
    %c0_7 = arith.constant 0 : index
    %8 = vector.load %arg4[%c0_6, %c0_7] : memref<128x128xbf16, #tpu.memory_space<vmem>>, vector<128x128xbf16>
    %9 = arith.truncf %7 : vector<128x256xf32> to vector<128x256xbf16>
    %cst_8 = arith.constant dense<0.000000e+00> : vector<128x256xf32>
    %10 = tpu.matmul %8, %9, %cst_8 {dimension_numbers = #tpu.dot_dimension_numbers<[1], [0], [0], [1], [0, 0, 1, 1], [], []>} : vector<128x128xbf16>, vector<128x256xbf16>, vector<128x256xf32> -> vector<128x256xf32>
    %c0_9 = arith.constant 0 : index
    %c0_10 = arith.constant 0 : index
    %11 = vector.load %arg5[%c0_9, %c0_10] : memref<128x1xf32, #tpu.memory_space<vmem>>, vector<128x1xf32>
    %12 = vector.broadcast %11 : vector<128x1xf32> to vector<128x256xf32>
    %13 = arith.addf %10, %12 : vector<128x256xf32>
    %cst_11 = arith.constant 0.000000e+00 : f32
    %14 = vector.broadcast %cst_11 : f32 to vector<128x256xf32>
    %15 = arith.maximumf %13, %14 : vector<128x256xf32>
    %c0_12 = arith.constant 0 : index
    %c0_13 = arith.constant 0 : index
    %16 = vector.load %arg6[%c0_12, %c0_13] : memref<128x1xf32, #tpu.memory_space<vmem>>, vector<128x1xf32>
    %17 = vector.broadcast %16 : vector<128x1xf32> to vector<128x256xf32>
    %18 = arith.mulf %15, %17 : vector<128x256xf32>
    %cst_14 = arith.constant dense<0.000000e+00> : vector<256xf32>
    %19 = vector.multi_reduction <add>, %18, %cst_14 [0] : vector<128x256xf32> to vector<256xf32>
    %20 = vector.shape_cast %19 : vector<256xf32> to vector<1x256xf32>
    %c0_15 = arith.constant 0 : index
    %c0_16 = arith.constant 0 : index
    %21 = vector.load %arg7[%c0_15, %c0_16] : memref<1x1xf32, #tpu.memory_space<vmem>>, vector<1x1xf32>
    %22 = vector.broadcast %21 : vector<1x1xf32> to vector<1x256xf32>
    %23 = arith.addf %20, %22 : vector<1x256xf32>
    %c0_17 = arith.constant 0 : index
    %c0_18 = arith.constant 0 : index
    %24 = vector.load %arg8[%c0_17, %c0_18] : memref<1x256xf32, #tpu.memory_space<vmem>>, vector<1x256xf32>
    tpu.vector_store %arg8[%c0_17, %c0_18], %23 {strides = array<i32>} : memref<1x256xf32, #tpu.memory_space<vmem>>, vector<1x256xf32>,
    return
  }
  func.func @transform_0(%arg0: i32) -> (i32, i32) {
    %c0_i32 = arith.constant 0 : i32
    %c0_i32_0 = arith.constant 0 : i32
    return %c0_i32, %arg0 : i32, i32
  }
  func.func @transform_1(%arg0: i32) -> (i32, i32) {
    %c0_i32 = arith.constant 0 : i32
    %c0_i32_0 = arith.constant 0 : i32
    %c0_i32_1 = arith.constant 0 : i32
    return %c0_i32, %c0_i32_0 : i32, i32
  }
  func.func @transform_2(%arg0: i32) -> (i32, i32) {
    %c0_i32 = arith.constant 0 : i32
    %c0_i32_0 = arith.constant 0 : i32
    %c0_i32_1 = arith.constant 0 : i32
    return %c0_i32, %c0_i32_0 : i32, i32
  }
  func.func @transform_3(%arg0: i32) -> (i32, i32) {
    %c0_i32 = arith.constant 0 : i32
    %c0_i32_0 = arith.constant 0 : i32
    %c0_i32_1 = arith.constant 0 : i32
    return %c0_i32, %c0_i32_0 : i32, i32
  }
  func.func @transform_4(%arg0: i32) -> (i32, i32) {
    %c0_i32 = arith.constant 0 : i32
    %c0_i32_0 = arith.constant 0 : i32
    %c0_i32_1 = arith.constant 0 : i32
    return %c0_i32, %c0_i32_0 : i32, i32
  }
  func.func @transform_5(%arg0: i32) -> (i32, i32) {
    %c0_i32 = arith.constant 0 : i32
    %c0_i32_0 = arith.constant 0 : i32
    %c0_i32_1 = arith.constant 0 : i32
    return %c0_i32, %c0_i32_0 : i32, i32
  }
  func.func @transform_6(%arg0: i32) -> (i32, i32) {
    %c0_i32 = arith.constant 0 : i32
    %c0_i32_0 = arith.constant 0 : i32
    %c0_i32_1 = arith.constant 0 : i32
    return %c0_i32, %c0_i32_0 : i32, i32
  }
  func.func @transform_7(%arg0: i32) -> (i32, i32) {
    %c0_i32 = arith.constant 0 : i32
    %c0_i32_0 = arith.constant 0 : i32
    return %c0_i32, %arg0 : i32, i32
  }
}

</mosaic_0001>

<llo_original>
// kernel: sepsis_forward.1
$region0: #{sepsis_forward.1}
  #allocation0 [shape = 'u32[]', space=smem, size = 0x4, offset = 0x4, fixed_abs, tag = 'smem constant byte address 0x4 - core index']
  #allocation1 [shape = 'u32[144,128]{1,0:T(1,128)}', space=vmem, size = 0x12000, scoped, tag = 'internal scratch']
  #allocation2 [shape = 'f32[1,1]{1,0:T(1,128)S(1)}', space=vmem, size = 0x200, scoped, tag = 'scoped memory for sepsis_forward.1']
  %s0 = inlined_call_operand.vmem [shape: bf16[16,512], index: 0, kind: input, shape index: {}]
  %s1 = inlined_call_operand.vmem [shape: bf16[128,16], index: 1, kind: input, shape index: {}]
  %s2 = inlined_call_operand.vmem [shape: f32[128,1], index: 2, kind: input, shape index: {}]
  %s3 = inlined_call_operand.vmem [shape: bf16[128,128], index: 3, kind: input, shape index: {}]
  %s4 = inlined_call_operand.vmem [shape: f32[128,1], index: 4, kind: input, shape index: {}]
  %s5 = inlined_call_operand.vmem [shape: f32[128,1], index: 5, kind: input, shape index: {}]
  %s6 = inlined_call_operand.<no memory space> [shape: f32[1,1], index: 6, kind: input, shape index: {}]
  %s7 = inlined_call_operand.hbm [shape: f32[1,512], index: 7, kind: output, shape index: {}]
  %s8 = sld [smem:[#allocation0]]
  $region99: #{sepsis_forward.1} parent=0
    _
  %s10 = ssub.s32 1, %s8
  %s11 = scalar_select 0, %s10, %s8
  %v12 = vstv %s6
  %13 = vst [vmem:[#allocation2] sm:$0x1] %v12
  $region1: #{sepsis_forward.1} parent=0
    #allocation3 [shape = 'u8[16384]{0}', space=vmem, size = 0x4000, scoped, tag = 'input window, operand 0']
    #allocation4 [shape = 'u8[2048]{0}', space=vmem, size = 0x800, scoped, tag = 'output window, operand 0']
    #allocation5 [shape = 's32[2]{0}', space=sflag, size = 0x8, scoped, tag = 'scoped memory for sepsis_forward.1']
    %14 = vsyncpa [#allocation5], 0
    %s15 = scalar_lea.sflag [#allocation5], 1
    %16 = vsyncpa %s15, 0
    loop: start=0, step=1, limit=4
    $region2: #{sepsis_forward.1} parent=1 // loop_pre_header
      _
    $region3: #{sepsis_forward.1} parent=1 // loop_header
      %s18 = sphi 0, %s22
      %p19 = scmp.ge.s32.totalorder %s18, 4
      %s28 = sphi 0, %s30
      %s31 = sphi 0, %s28
      %s32 = sphi 0, %s31
      %s48 = sphi 0, %s32
      %s52 = sphi 0, %s52
      %s54 = sphi 0, %s52
      %s55 = sphi 0, %s54
      %s69 = sphi 0, %s55
      %s73 = sphi 0, %s73
      %s75 = sphi 0, %s73
      %s76 = sphi 0, %s75
      %s90 = sphi 0, %s76
      %s94 = sphi 0, %s94
      %s96 = sphi 0, %s94
      %s97 = sphi 0, %s96
      %s111 = sphi 0, %s97
      %s115 = sphi 0, %s115
      %s117 = sphi 0, %s115
      %s118 = sphi 0, %s117
      %s132 = sphi 0, %s118
      %s136 = sphi 0, %s136
      %s138 = sphi 0, %s136
      %s139 = sphi 0, %s138
      %s153 = sphi 0, %s139
      %s157 = sphi 0, %s157
      %s159 = sphi 0, %s157
      %s160 = sphi 0, %s159
      %s174 = sphi 0, %s160
      %s180 = sphi 0, %s182
      %s183 = sphi 0, %s180
      %s184 = sphi 0, %s183
      %s200 = sphi 0, %s184
    $region4: #{sepsis_forward.1} parent=1 // loop_header_branch
      %21 = sbr.rel (%p19) target = $region8
    $region5: #{sepsis_forward.1} parent=1 // loop_body
      %s23 = ssub.s32 %s18, 1
      %s24 = ssub.s32 %s18, 2
      %s25 = sadd.s32 %s18, 1
      %s26 = ssub.s32 %s18, %s25
      %p27 = scmp.eq.s32.totalorder %s26, 0
      %s29 = sadd.s32 %s28, 1
      %s30 = scalar_select %p27, %s28, %s29
      %p33 = pneg %p27
      %p34 = scmp.eq.s32.totalorder %s18, 1
      %p35 = por %p33, %p34
      %p36 = scmp.ne.s32.totalorder %s28, %s31
      %p37 = scmp.eq.s32.totalorder %s18, 0
      %p38 = por %p36, %p37
      %p39 = scmp.ne.s32.totalorder %s28, %s31
      %p40 = scmp.eq.s32.totalorder %s23, 1
      %p41 = por %p39, %p40
      %p42 = scmp.ne.s32.totalorder %s31, %s32
      %p43 = scmp.eq.s32.totalorder %s23, 0
      %p44 = por %p42, %p43
      %p45 = scmp.ne.s32.totalorder %s31, %s32
      %p46 = scmp.eq.s32.totalorder %s24, 1
      %p47 = por %p45, %p46
      %p49 = scmp.ne.s32.totalorder %s32, %s48
      %p50 = scmp.eq.s32.totalorder %s24, 0
      %p51 = por %p49, %p50
      %s53 = sadd.s32 %s52, 1
      %p56 = scmp.eq.s32.totalorder %s18, 1
      %p57 = scmp.ne.s32.totalorder %s52, %s54
      %p58 = scmp.eq.s32.totalorder %s18, 0
      %p59 = por %p57, %p58
      %p60 = scmp.ne.s32.totalorder %s52, %s54
      %p61 = scmp.eq.s32.totalorder %s23, 1
      %p62 = por %p60, %p61
      %p63 = scmp.ne.s32.totalorder %s54, %s55
      %p64 = scmp.eq.s32.totalorder %s23, 0
      %p65 = por %p63, %p64
      %p66 = scmp.ne.s32.totalorder %s54, %s55
      %p67 = scmp.eq.s32.totalorder %s24, 1
      %p68 = por %p66, %p67
      %p70 = scmp.ne.s32.totalorder %s55, %s69
      %p71 = scmp.eq.s32.totalorder %s24, 0
      %p72 = por %p70, %p71
      %s74 = sadd.s32 %s73, 1
      %p77 = scmp.eq.s32.totalorder %s18, 1
      %p78 = scmp.ne.s32.totalorder %s73, %s75
      %p79 = scmp.eq.s32.totalorder %s18, 0
      %p80 = por %p78, %p79
      %p81 = scmp.ne.s32.totalorder %s73, %s75
      %p82 = scmp.eq.s32.totalorder %s23, 1
      %p83 = por %p81, %p82
      %p84 = scmp.ne.s32.totalorder %s75, %s76
      %p85 = scmp.eq.s32.totalorder %s23, 0
      %p86 = por %p84, %p85
      %p87 = scmp.ne.s32.totalorder %s75, %s76
      %p88 = scmp.eq.s32.totalorder %s24, 1
      %p89 = por %p87, %p88
      %p91 = scmp.ne.s32.totalorder %s76, %s90
      %p92 = scmp.eq.s32.totalorder %s24, 0
      %p93 = por %p91, %p92
      %s95 = sadd.s32 %s94, 1
      %p98 = scmp.eq.s32.totalorder %s18, 1
      %p99 = scmp.ne.s32.totalorder %s94, %s96
      %p100 = scmp.eq.s32.totalorder %s18, 0
      %p101 = por %p99, %p100
      %p102 = scmp.ne.s32.totalorder %s94, %s96
      %p103 = scmp.eq.s32.totalorder %s23, 1
      %p104 = por %p102, %p103
      %p105 = scmp.ne.s32.totalorder %s96, %s97
      %p106 = scmp.eq.s32.totalorder %s23, 0
      %p107 = por %p105, %p106
      %p108 = scmp.ne.s32.totalorder %s96, %s97
      %p109 = scmp.eq.s32.totalorder %s24, 1
      %p110 = por %p108, %p109
      %p112 = scmp.ne.s32.totalorder %s97, %s111
      %p113 = scmp.eq.s32.totalorder %s24, 0
      %p114 = por %p112, %p113
      %s116 = sadd.s32 %s115, 1
      %p119 = scmp.eq.s32.totalorder %s18, 1
      %p120 = scmp.ne.s32.totalorder %s115, %s117
      %p121 = scmp.eq.s32.totalorder %s18, 0
      %p122 = por %p120, %p121
      %p123 = scmp.ne.s32.totalorder %s115, %s117
      %p124 = scmp.eq.s32.totalorder %s23, 1
      %p125 = por %p123, %p124
      %p126 = scmp.ne.s32.totalorder %s117, %s118
      %p127 = scmp.eq.s32.totalorder %s23, 0
      %p128 = por %p126, %p127
      %p129 = scmp.ne.s32.totalorder %s117, %s118
      %p130 = scmp.eq.s32.totalorder %s24, 1
      %p131 = por %p129, %p130
      %p133 = scmp.ne.s32.totalorder %s118, %s132
      %p134 = scmp.eq.s32.totalorder %s24, 0
      %p135 = por %p133, %p134
      %s137 = sadd.s32 %s136, 1
      %p140 = scmp.eq.s32.totalorder %s18, 1
      %p141 = scmp.ne.s32.totalorder %s136, %s138
      %p142 = scmp.eq.s32.totalorder %s18, 0
      %p143 = por %p141, %p142
      %p144 = scmp.ne.s32.totalorder %s136, %s138
      %p145 = scmp.eq.s32.totalorder %s23, 1
      %p146 = por %p144, %p145
      %p147 = scmp.ne.s32.totalorder %s138, %s139
      %p148 = scmp.eq.s32.totalorder %s23, 0
      %p149 = por %p147, %p148
      %p150 = scmp.ne.s32.totalorder %s138, %s139
      %p151 = scmp.eq.s32.totalorder %s24, 1
      %p152 = por %p150, %p151
      %p154 = scmp.ne.s32.totalorder %s139, %s153
      %p155 = scmp.eq.s32.totalorder %s24, 0
      %p156 = por %p154, %p155
      %s158 = sadd.s32 %s157, 1
      %p161 = scmp.eq.s32.totalorder %s18, 1
      %p162 = scmp.ne.s32.totalorder %s157, %s159
      %p163 = scmp.eq.s32.totalorder %s18, 0
      %p164 = por %p162, %p163
      %p165 = scmp.ne.s32.totalorder %s157, %s159
      %p166 = scmp.eq.s32.totalorder %s23, 1
      %p167 = por %p165, %p166
      %p168 = scmp.ne.s32.totalorder %s159, %s160
      %p169 = scmp.eq.s32.totalorder %s23, 0
      %p170 = por %p168, %p169
      %p171 = scmp.ne.s32.totalorder %s159, %s160
      %p172 = scmp.eq.s32.totalorder %s24, 1
      %p173 = por %p171, %p172
      %p175 = scmp.ne.s32.totalorder %s160, %s174
      %p176 = scmp.eq.s32.totalorder %s24, 0
      %p177 = por %p175, %p176
      %s178 = ssub.s32 %s18, %s25
      %p179 = scmp.eq.s32.totalorder %s178, 0
      %s181 = sadd.s32 %s180, 1
      %s182 = scalar_select %p179, %s180, %s181
      %p185 = pneg %p179
      %p186 = scmp.eq.s32.totalorder %s18, 1
      %p187 = por %p185, %p186
      %p188 = scmp.ne.s32.totalorder %s180, %s183
      %p189 = scmp.eq.s32.totalorder %s18, 0
      %p190 = por %p188, %p189
      %p191 = scmp.ne.s32.totalorder %s180, %s183
      %p192 = scmp.eq.s32.totalorder %s23, 1
      %p193 = por %p191, %p192
      %p194 = scmp.ne.s32.totalorder %s183, %s184
      %p195 = scmp.eq.s32.totalorder %s23, 0
      %p196 = por %p194, %p195
      %p197 = scmp.ne.s32.totalorder %s183, %s184
      %p198 = scmp.eq.s32.totalorder %s24, 1
      %p199 = por %p197, %p198
      %p201 = scmp.ne.s32.totalorder %s184, %s200
      %p202 = scmp.eq.s32.totalorder %s24, 0
      %p203 = por %p201, %p202
      %p204 = scmp.le.s32.totalorder 1, %s18
      %p205 = scmp.lt.s32.totalorder %s18, 3
      %p206 = pnand %p204, %p205
      %p207 = pneg %p206
      // Predicated region
      $region9: #{sepsis_forward.1} parent=5 // pred_check
        _
      $region10: #{sepsis_forward.1} parent=5 // pred_check_branch
        %209 = sbr.rel (%p206) target = $region12
      $region11: #{sepsis_forward.1} parent=5 // pred_region
        %s210 = ssub.s32 %s18, 1
        // Predicated region
        $region13: #{sepsis_forward.1} parent=11 // pred_check
          %p211 = pneg %p65
        $region14: #{sepsis_forward.1} parent=11 // pred_check_branch
          %213 = sbr.rel (%p211) target = $region16
        $region15: #{sepsis_forward.1} parent=11 // pred_region
          _
        $region16: #{sepsis_forward.1} parent=11 // pred_fallthru
          _
        // Predicated region
        $region17: #{sepsis_forward.1} parent=11 // pred_check
          %p214 = pneg %p86
        $region18: #{sepsis_forward.1} parent=11 // pred_check_branch
          %216 = sbr.rel (%p214) target = $region20
        $region19: #{sepsis_forward.1} parent=11 // pred_region
          _
        $region20: #{sepsis_forward.1} parent=11 // pred_fallthru
          _
        // Predicated region
        $region21: #{sepsis_forward.1} parent=11 // pred_check
          %p217 = pneg %p107
        $region22: #{sepsis_forward.1} parent=11 // pred_check_branch
          %219 = sbr.rel (%p217) target = $region24
        $region23: #{sepsis_forward.1} parent=11 // pred_region
          _
        $region24: #{sepsis_forward.1} parent=11 // pred_fallthru
          _
        // Predicated region
        $region25: #{sepsis_forward.1} parent=11 // pred_check
          %p220 = pneg %p128
        $region26: #{sepsis_forward.1} parent=11 // pred_check_branch
          %222 = sbr.rel (%p220) target = $region28
        $region27: #{sepsis_forward.1} parent=11 // pred_region
          _
        $region28: #{sepsis_forward.1} parent=11 // pred_fallthru
          _
        // Predicated region
        $region29: #{sepsis_forward.1} parent=11 // pred_check
          %p223 = pneg %p149
        $region30: #{sepsis_forward.1} parent=11 // pred_check_branch
          %225 = sbr.rel (%p223) target = $region32
        $region31: #{sepsis_forward.1} parent=11 // pred_region
          _
        $region32: #{sepsis_forward.1} parent=11 // pred_fallthru
          _
        // Predicated region
        $region33: #{sepsis_forward.1} parent=11 // pred_check
          %p226 = pneg %p170
        $region34: #{sepsis_forward.1} parent=11 // pred_check_branch
          %228 = sbr.rel (%p226) target = $region36
        $region35: #{sepsis_forward.1} parent=11 // pred_region
          _
        $region36: #{sepsis_forward.1} parent=11 // pred_fallthru
          _
      $region12: #{sepsis_forward.1} parent=5 // pred_fallthru
        _
      %p229 = scmp.lt.s32.totalorder %s18, 2
      // Predicated region
      $region37: #{sepsis_forward.1} parent=5 // pred_check
        %p230 = pneg %p229
      $region38: #{sepsis_forward.1} parent=5 // pred_check_branch
        %232 = sbr.rel (%p230) target = $region40
      $region39: #{sepsis_forward.1} parent=5 // pred_region
        // Predicated region
        $region41: #{sepsis_forward.1} parent=39 // pred_check
          %p233 = pneg %p38
        $region42: #{sepsis_forward.1} parent=39 // pred_check_branch
          %235 = sbr.rel (%p233) target = $region44
        $region43: #{sepsis_forward.1} parent=39 // pred_region
          %s236 = sand.u32 %s28, 1
          %s237 = sand.u32 %s28, 1
          %s238 = smul.addr %s237, 16
          %s239 = scalar_lea.vmem [#allocation3], %s238
          %s240 = smul.u32 2, %s18
          %s241 = smul.addr %s240, 4
          %s242 = scalar_lea.vmem %s0, %s241
          // Predicated region
          $region45: #{sepsis_forward.1} parent=43 // pred_check
            _
          $region46: #{sepsis_forward.1} parent=43 // pred_check_branch
            %244 = sbr.rel (0) target = $region48
          $region47: #{sepsis_forward.1} parent=43 // pred_region
            // Predicated region
            $region49: #{sepsis_forward.1} parent=47 // pred_check
              _
            $region50: #{sepsis_forward.1} parent=47 // pred_check_branch
              %246 = sbr.rel (0) target = $region52
            $region51: #{sepsis_forward.1} parent=47 // pred_region
              // Predicated region
              $region64: #{sepsis_forward.1} parent=51 // pred_check
                _
              $region65: #{sepsis_forward.1} parent=51 // pred_check_branch
                %263 = sbr.rel (0) target = $region67
              $region66: #{sepsis_forward.1} parent=51 // pred_region
                loop: start=0, step=1, limit=1
                $region68: #{sepsis_forward.1} parent=66 // loop_pre_header
                  _
                $region69: #{sepsis_forward.1} parent=66 // loop_header
                  %s265 = sphi 0, %s269
                  %p266 = scmp.ge.s32.totalorder %s265, 1
                  %s270 = sphi %s242, %s242
                  %s271 = sphi %s239, %s239
                $region70: #{sepsis_forward.1} parent=66 // loop_header_branch
                  %268 = sbr.rel (%p266) target = $region74
                $region71: #{sepsis_forward.1} parent=66 // loop_body
                  %v272 = vld [vmem:[%s270] sm:$0xff]
                  %273 = vst [vmem:[%s271] sm:$0xff] %v272
                  %v274 = vld [vmem:[%s270 + $0x10] sm:$0xff]
                  %275 = vst [vmem:[%s271 + $0x8] sm:$0xff] %v274
                $region72: #{sepsis_forward.1} parent=66 // loop_footer
                  %s269 = sadd.s32 1, %s265
                $region73: #{sepsis_forward.1} parent=66 // loop_footer_branch
                  %264 = sbr.rel target = $region69
                $region74: #{sepsis_forward.1} parent=66 // loop_exit
                  _
              $region67: #{sepsis_forward.1} parent=51 // pred_fallthru
                _
              // Predicated region
              $region75: #{sepsis_forward.1} parent=51 // pred_check
                _
              $region76: #{sepsis_forward.1} parent=51 // pred_check_branch
                %277 = sbr.rel target = $region78
              $region77: #{sepsis_forward.1} parent=51 // pred_region
                _
              $region78: #{sepsis_forward.1} parent=51 // pred_fallthru
                _
            $region52: #{sepsis_forward.1} parent=47 // pred_fallthru
              _
            // Predicated region
            $region53: #{sepsis_forward.1} parent=47 // pred_check
              _
            $region54: #{sepsis_forward.1} parent=47 // pred_check_branch
              %248 = sbr.rel target = $region56
            $region55: #{sepsis_forward.1} parent=47 // pred_region
              loop: start=0, step=1, limit=1
              $region57: #{sepsis_forward.1} parent=55 // loop_pre_header
                _
              $region58: #{sepsis_forward.1} parent=55 // loop_header
                %s251 = sphi 0, %s255
                %p252 = scmp.ge.s32.totalorder %s251, 1
                %s256 = sphi %s242, %s242
                %s257 = sphi %s239, %s239
              $region59: #{sepsis_forward.1} parent=55 // loop_header_branch
                %254 = sbr.rel (%p252) target = $region63
              $region60: #{sepsis_forward.1} parent=55 // loop_body
                %v258 = vld [vmem:[%s256] sm:$0xff]
                %259 = vst [vmem:[%s257] sm:$0xff] %v258
                %v260 = vld [vmem:[%s256 + $0x10] sm:$0xff]
                %261 = vst [vmem:[%s257 + $0x8] sm:$0xff] %v260
              $region61: #{sepsis_forward.1} parent=55 // loop_footer
                %s255 = sadd.s32 1, %s251
              $region62: #{sepsis_forward.1} parent=55 // loop_footer_branch
                %250 = sbr.rel target = $region58
              $region63: #{sepsis_forward.1} parent=55 // loop_exit
                _
            $region56: #{sepsis_forward.1} parent=47 // pred_fallthru
              _
          $region48: #{sepsis_forward.1} parent=43 // pred_fallthru
            _
          %278 = vnop
        $region44: #{sepsis_forward.1} parent=39 // pred_fallthru
          _
      $region40: #{sepsis_forward.1} parent=5 // pred_fallthru
        _
      %p279 = scmp.le.s32.totalorder 1, %s18
      %p280 = scmp.lt.s32.totalorder %s18, 3
      %p281 = pnand %p279, %p280
      %p282 = pneg %p281
      // Predicated region
      $region79: #{sepsis_forward.1} parent=5 // pred_check
        _
      $region80: #{sepsis_forward.1} parent=5 // pred_check_branch
        %284 = sbr.rel (%p281) target = $region82
      $region81: #{sepsis_forward.1} parent=5 // pred_region
        %s285 = ssub.s32 %s18, 1
        %s286 = sand.u32 %s31, 1
        %s287 = sand.u32 %s31, 1
        %s288 = smul.addr %s287, 16
        %s289 = scalar_lea.vmem [#allocation3], %s288
        // Predicated region
        $region83: #{sepsis_forward.1} parent=81 // pred_check
          %p290 = pneg %p44
        $region84: #{sepsis_forward.1} parent=81 // pred_check_branch
          %292 = sbr.rel (%p290) target = $region86
        $region85: #{sepsis_forward.1} parent=81 // pred_region
          _
        $region86: #{sepsis_forward.1} parent=81 // pred_fallthru
          _
        %s293 = sand.u32 %s31, 1
        %s294 = sand.u32 %s31, 1
        %s295 = smul.addr %s294, 16
        %s296 = scalar_lea.vmem [#allocation3], %s295
        %p297 = pneg %p44
        %p298 = pneg %p41
        %p299 = pneg %p65
        %p300 = pneg %p62
        %p301 = pneg %p86
        %p302 = pneg %p83
        %p303 = pneg %p107
        %p304 = pneg %p104
        %p305 = pneg %p128
        %p306 = pneg %p125
        %p307 = pneg %p149
        %p308 = pneg %p146
        %p309 = pneg %p170
        %p310 = pneg %p167
        %p311 = pneg %p196
        %p312 = pneg %p193
        %s313 = sand.u32 %s183, 1
        %s314 = scalar_lea.sflag [#allocation5], %s313
        %s315 = sand.u32 %s183, 1
        %s316 = smul.addr %s315, 2
        %s317 = scalar_lea.vmem [#allocation4], %s316
        %s318 = smul.u32 2, %s23
        %s319 = smul.u32 2, %s23
        %v321 = vld [vmem:[%s1] sm:$0xf]
        %v322 = vld [vmem:[%s1 + $0x4] sm:$0xf]
        %v323 = vld [vmem:[%s1 + $0x8] sm:$0xf]
        %v324 = vld [vmem:[%s1 + $0xc] sm:$0xf]
        %v325 = vld [vmem:[%s1 + $0x10] sm:$0xf]
        %v326 = vld [vmem:[%s1 + $0x14] sm:$0xf]
        %v327 = vld [vmem:[%s1 + $0x18] sm:$0xf]
        %v328 = vld [vmem:[%s1 + $0x1c] sm:$0xf]
        %v329 = vld [vmem:[%s1 + $0x20] sm:$0xf]
        %v330 = vld [vmem:[%s1 + $0x24] sm:$0xf]
        %v331 = vld [vmem:[%s1 + $0x28] sm:$0xf]
        %v332 = vld [vmem:[%s1 + $0x2c] sm:$0xf]
        %v333 = vld [vmem:[%s1 + $0x30] sm:$0xf]
        %v334 = vld [vmem:[%s1 + $0x34] sm:$0xf]
        %v335 = vld [vmem:[%s1 + $0x38] sm:$0xf]
        %v336 = vld [vmem:[%s1 + $0x3c] sm:$0xf]
        %v337 = vld [vmem:[%s289] sm:$0xff]
        %v338 = vld [vmem:[%s289 + $0x8] sm:$0xff]
        %v339 = vld [vmem:[%s2] sm:$0xff]
        %v340 = vld [vmem:[%s2 + $0x8] sm:$0xff]
        %v341 = vld [vmem:[%s2 + $0x10] sm:$0xff]
        %v342 = vld [vmem:[%s2 + $0x18] sm:$0xff]
        %v343 = vld [vmem:[%s2 + $0x20] sm:$0xff]
        %v344 = vld [vmem:[%s2 + $0x28] sm:$0xff]
        %v345 = vld [vmem:[%s2 + $0x30] sm:$0xff]
        %v346 = vld [vmem:[%s2 + $0x38] sm:$0xff]
        %v347 = vld [vmem:[%s2 + $0x40] sm:$0xff]
        %v348 = vld [vmem:[%s2 + $0x48] sm:$0xff]
        %v349 = vld [vmem:[%s2 + $0x50] sm:$0xff]
        %v350 = vld [vmem:[%s2 + $0x58] sm:$0xff]
        %v351 = vld [vmem:[%s2 + $0x60] sm:$0xff]
        %v352 = vld [vmem:[%s2 + $0x68] sm:$0xff]
        %v353 = vld [vmem:[%s2 + $0x70] sm:$0xff]
        %v354 = vld [vmem:[%s2 + $0x78] sm:$0xff]
        %356 = vset.pattern.permute.xlu0 0
        %357 = vperm.xlu0 %356, %v339
        %v358 = vpop.permute.xlu0 %357
        %361 = vset.pattern.permute.xlu0 0
        %362 = vperm.xlu0 %361, %v340
        %v363 = vpop.permute.xlu0 %362
        %366 = vset.pattern.permute.xlu0 0
        %367 = vperm.xlu0 %366, %v341
        %v368 = vpop.permute.xlu0 %367
        %371 = vset.pattern.permute.xlu0 0
        %372 = vperm.xlu0 %371, %v342
        %v373 = vpop.permute.xlu0 %372
        %376 = vset.pattern.permute.xlu0 0
        %377 = vperm.xlu0 %376, %v343
        %v378 = vpop.permute.xlu0 %377
        %381 = vset.pattern.permute.xlu0 0
        %382 = vperm.xlu0 %381, %v344
        %v383 = vpop.permute.xlu0 %382
        %386 = vset.pattern.permute.xlu0 0
        %387 = vperm.xlu0 %386, %v345
        %v388 = vpop.permute.xlu0 %387
        %391 = vset.pattern.permute.xlu0 0
        %392 = vperm.xlu0 %391, %v346
        %v393 = vpop.permute.xlu0 %392
        %396 = vset.pattern.permute.xlu0 0
        %397 = vperm.xlu0 %396, %v347
        %v398 = vpop.permute.xlu0 %397
        %401 = vset.pattern.permute.xlu0 0
        %402 = vperm.xlu0 %401, %v348
        %v403 = vpop.permute.xlu0 %402
        %406 = vset.pattern.permute.xlu0 0
        %407 = vperm.xlu0 %406, %v349
        %v408 = vpop.permute.xlu0 %407
        %411 = vset.pattern.permute.xlu0 0
        %412 = vperm.xlu0 %411, %v350
        %v413 = vpop.permute.xlu0 %412
        %416 = vset.pattern.permute.xlu0 0
        %417 = vperm.xlu0 %416, %v351
        %v418 = vpop.permute.xlu0 %417
        %421 = vset.pattern.permute.xlu0 0
        %422 = vperm.xlu0 %421, %v352
        %v423 = vpop.permute.xlu0 %422
        %426 = vset.pattern.permute.xlu0 0
        %427 = vperm.xlu0 %426, %v353
        %v428 = vpop.permute.xlu0 %427
        %431 = vset.pattern.permute.xlu0 0
        %432 = vperm.xlu0 %431, %v354
        %v433 = vpop.permute.xlu0 %432
        %v451 = vunpack.c.l.b16 %v321
        %v452 = vunpack.c.l.b16 %v322
        %v453 = vunpack.c.l.b16 %v323
        %v454 = vunpack.c.l.b16 %v324
        %v455 = vunpack.c.l.b16 %v325
        %v456 = vunpack.c.l.b16 %v326
        %v457 = vunpack.c.l.b16 %v327
        %v458 = vunpack.c.l.b16 %v328
        %v459 = vunpack.c.l.b16 %v329
        %v460 = vunpack.c.l.b16 %v330
        %v461 = vunpack.c.l.b16 %v331
        %v462 = vunpack.c.l.b16 %v332
        %v463 = vunpack.c.l.b16 %v333
        %v464 = vunpack.c.l.b16 %v334
        %v465 = vunpack.c.l.b16 %v335
        %v466 = vunpack.c.l.b16 %v336
        %v467 = vpack.c.b16 %v452, %v451
        %v468 = vpack.c.b16 %v454, %v453
        %v469 = vpack.c.b16 %v456, %v455
        %v470 = vpack.c.b16 %v458, %v457
        %v471 = vpack.c.b16 %v460, %v459
        %v472 = vpack.c.b16 %v462, %v461
        %v473 = vpack.c.b16 %v464, %v463
        %v474 = vpack.c.b16 %v466, %v465
        %v477 = vunpack.c.l.b16 %v337
        %v478 = vunpack.c.h.b16 %v337
        %v479 = vunpack.c.l.b16 %v338
        %v480 = vunpack.c.h.b16 %v338
        %v481 = vpack.c.b16 %v479, %v477
        %v482 = vpack.c.b16 %v480, %v478
        %vm485 = vcmask 130048
        %v487 = vsel %vm485, %v467, 0
        %v490 = vsel %vm485, %v468, 0
        %v493 = vsel %vm485, %v469, 0
        %v496 = vsel %vm485, %v470, 0
        %v499 = vsel %vm485, %v471, 0
        %v502 = vsel %vm485, %v472, 0
        %v505 = vsel %vm485, %v473, 0
        %v508 = vsel %vm485, %v474, 0
        %510 = vmatprep.subr.bf16.mxu0 %v482
        %511 = vmatpush1.bf16.msra.mxu0 %v481
        %512 = vmatprep.subr.bf16.mxu0 0
        %513 = vmatpush1.bf16.msra.mxu0 0
        %514 = vmatprep.subr.bf16.mxu0 0
        %515 = vmatpush1.bf16.msra.mxu0 0
        %516 = vmatprep.subr.bf16.mxu0 0
        %517 = vmatpush1.bf16.msra.mxu0 0
        %518 = vmatprep.subr.bf16.mxu0 0
        %519 = vmatpush1.bf16.msra.mxu0 0
        %520 = vmatprep.subr.bf16.mxu0 0
        %521 = vmatpush1.bf16.msra.mxu0 0
        %522 = vmatprep.subr.bf16.mxu0 0
        %523 = vmatpush1.bf16.msra.mxu0 0
        %524 = vmatprep.subr.bf16.mxu0 0
        %525 = vmatpush1.bf16.msra.mxu0 0
        %526 = vmatprep.subr.bf16.mxu0 0
        %527 = vmatpush1.bf16.msra.mxu0 0
        %528 = vmatprep.subr.bf16.mxu0 0
        %529 = vmatpush1.bf16.msra.mxu0 0
        %530 = vmatprep.subr.bf16.mxu0 0
        %531 = vmatpush1.bf16.msra.mxu0 0
        %532 = vmatprep.subr.bf16.mxu0 0
        %533 = vmatpush1.bf16.msra.mxu0 0
        %534 = vmatprep.subr.bf16.mxu0 0
        %535 = vmatpush1.bf16.msra.mxu0 0
        %536 = vmatprep.subr.bf16.mxu0 0
        %537 = vmatpush1.bf16.msra.mxu0 0
        %538 = vmatprep.subr.bf16.mxu0 0
        %539 = vmatpush1.bf16.msra.mxu0 0
        %540 = vmatprep.subr.bf16.mxu0 0
        %541 = vmatpush1.bf16.msra.mxu0 0
        %542 = vmatprep.mubr.bf16.mxu0 0
        %543 = vmatmul.mubr.bf16.gmra.mrb[0].mxu0 %v487
        %v544 = vpop.f32.mrb[0].mxu0
        %v545 = vadd.f32 %v358, %v544
        %v546 = vpop.f32.mrb[0].mxu0
        %v547 = vadd.f32 %v358, %v546
        %v548 = vpop.f32.mrb[0].mxu0
        %v549 = vadd.f32 %v363, %v548
        %v550 = vpop.f32.mrb[0].mxu0
        %v551 = vadd.f32 %v363, %v550
        %552 = vmatprep.mubr.bf16.mxu0 0
        %553 = vmatmul.mubr.bf16.gmra.mrb[0].mxu0 %v490
        %v554 = vpop.f32.mrb[0].mxu0
        %v555 = vadd.f32 %v368, %v554
        %v556 = vpop.f32.mrb[0].mxu0
        %v557 = vadd.f32 %v368, %v556
        %v558 = vpop.f32.mrb[0].mxu0
        %v559 = vadd.f32 %v373, %v558
        %v560 = vpop.f32.mrb[0].mxu0
        %v561 = vadd.f32 %v373, %v560
        %562 = vmatprep.mubr.bf16.mxu0 0
        %563 = vmatmul.mubr.bf16.gmra.mrb[0].mxu0 %v493
        %v564 = vpop.f32.mrb[0].mxu0
        %v565 = vadd.f32 %v378, %v564
        %v566 = vpop.f32.mrb[0].mxu0
        %v567 = vadd.f32 %v378, %v566
        %v568 = vpop.f32.mrb[0].mxu0
        %v569 = vadd.f32 %v383, %v568
        %v570 = vpop.f32.mrb[0].mxu0
        %v571 = vadd.f32 %v383, %v570
        %572 = vmatprep.mubr.bf16.mxu0 0
        %573 = vmatmul.mubr.bf16.gmra.mrb[0].mxu0 %v496
        %v574 = vpop.f32.mrb[0].mxu0
        %v575 = vadd.f32 %v388, %v574
        %v576 = vpop.f32.mrb[0].mxu0
        %v577 = vadd.f32 %v388, %v576
        %v578 = vpop.f32.mrb[0].mxu0
        %v579 = vadd.f32 %v393, %v578
        %v580 = vpop.f32.mrb[0].mxu0
        %v581 = vadd.f32 %v393, %v580
        %582 = vmatprep.mubr.bf16.mxu0 0
        %583 = vmatmul.mubr.bf16.gmra.mrb[0].mxu0 %v499
        %v584 = vpop.f32.mrb[0].mxu0
        %v585 = vadd.f32 %v398, %v584
        %v586 = vpop.f32.mrb[0].mxu0
        %v587 = vadd.f32 %v398, %v586
        %v588 = vpop.f32.mrb[0].mxu0
        %v589 = vadd.f32 %v403, %v588
        %v590 = vpop.f32.mrb[0].mxu0
        %v591 = vadd.f32 %v403, %v590
        %592 = vmatprep.mubr.bf16.mxu0 0
        %593 = vmatmul.mubr.bf16.gmra.mrb[0].mxu0 %v502
        %v594 = vpop.f32.mrb[0].mxu0
        %v595 = vadd.f32 %v408, %v594
        %v596 = vpop.f32.mrb[0].mxu0
        %v597 = vadd.f32 %v408, %v596
        %v598 = vpop.f32.mrb[0].mxu0
        %v599 = vadd.f32 %v413, %v598
        %v600 = vpop.f32.mrb[0].mxu0
        %v601 = vadd.f32 %v413, %v600
        %602 = vmatprep.mubr.bf16.mxu0 0
        %603 = vmatmul.mubr.bf16.gmra.mrb[0].mxu0 %v505
        %v604 = vpop.f32.mrb[0].mxu0
        %v605 = vadd.f32 %v418, %v604
        %v606 = vpop.f32.mrb[0].mxu0
        %v607 = vadd.f32 %v418, %v606
        %v608 = vpop.f32.mrb[0].mxu0
        %v609 = vadd.f32 %v423, %v608
        %v610 = vpop.f32.mrb[0].mxu0
        %v611 = vadd.f32 %v423, %v610
        %612 = vmatprep.mubr.bf16.mxu0 0
        %613 = vmatmul.mubr.bf16.gmra.mrb[0].mxu0 %v508
        %v614 = vpop.f32.mrb[0].mxu0
        %v615 = vadd.f32 %v428, %v614
        %v616 = vpop.f32.mrb[0].mxu0
        %v617 = vadd.f32 %v428, %v616
        %v618 = vpop.f32.mrb[0].mxu0
        %v619 = vadd.f32 %v433, %v618
        %v620 = vpop.f32.mrb[0].mxu0
        %v621 = vadd.f32 %v433, %v620
        %622 = vdwg.mxu0
        %v623 = vmax.f32 %v545, 0.0
        %v624 = vmax.f32 %v547, 0.0
        %v625 = vmax.f32 %v549, 0.0
        %v626 = vmax.f32 %v551, 0.0
        %v627 = vmax.f32 %v555, 0.0
        %v628 = vmax.f32 %v557, 0.0
        %v629 = vmax.f32 %v559, 0.0
        %v630 = vmax.f32 %v561, 0.0
        %v631 = vmax.f32 %v565, 0.0
        %v632 = vmax.f32 %v567, 0.0
        %v633 = vmax.f32 %v569, 0.0
        %v634 = vmax.f32 %v571, 0.0
        %v635 = vmax.f32 %v575, 0.0
        %v636 = vmax.f32 %v577, 0.0
        %v637 = vmax.f32 %v579, 0.0
        %v638 = vmax.f32 %v581, 0.0
        %v639 = vmax.f32 %v585, 0.0
        %v640 = vmax.f32 %v587, 0.0
        %v641 = vmax.f32 %v589, 0.0
        %v642 = vmax.f32 %v591, 0.0
        %v643 = vmax.f32 %v595, 0.0
        %v644 = vmax.f32 %v597, 0.0
        %v645 = vmax.f32 %v599, 0.0
        %v646 = vmax.f32 %v601, 0.0
        %v647 = vmax.f32 %v605, 0.0
        %v648 = vmax.f32 %v607, 0.0
        %v649 = vmax.f32 %v609, 0.0
        %v650 = vmax.f32 %v611, 0.0
        %v651 = vmax.f32 %v615, 0.0
        %v652 = vmax.f32 %v617, 0.0
        %v653 = vmax.f32 %v619, 0.0
        %v654 = vmax.f32 %v621, 0.0
        %v655 = vld [vmem:[%s3] sm:$0xf]
        %v656 = vld [vmem:[%s3 + $0x4] sm:$0xf]
        %v657 = vld [vmem:[%s3 + $0x8] sm:$0xf]
        %v658 = vld [vmem:[%s3 + $0xc] sm:$0xf]
        %v659 = vld [vmem:[%s3 + $0x10] sm:$0xf]
        %v660 = vld [vmem:[%s3 + $0x14] sm:$0xf]
        %v661 = vld [vmem:[%s3 + $0x18] sm:$0xf]
        %v662 = vld [vmem:[%s3 + $0x1c] sm:$0xf]
        %v663 = vld [vmem:[%s3 + $0x20] sm:$0xf]
        %v664 = vld [vmem:[%s3 + $0x24] sm:$0xf]
        %v665 = vld [vmem:[%s3 + $0x28] sm:$0xf]
        %v666 = vld [vmem:[%s3 + $0x2c] sm:$0xf]
        %v667 = vld [vmem:[%s3 + $0x30] sm:$0xf]
        %v668 = vld [vmem:[%s3 + $0x34] sm:$0xf]
        %v669 = vld [vmem:[%s3 + $0x38] sm:$0xf]
        %v670 = vld [vmem:[%s3 + $0x3c] sm:$0xf]
        %v671 = vpack.c.bf16 %v625, %v623
        %v672 = vpack.c.bf16 %v626, %v624
        %v673 = vpack.c.bf16 %v629, %v627
        %v674 = vpack.c.bf16 %v630, %v628
        %v675 = vpack.c.bf16 %v633, %v631
        %v676 = vpack.c.bf16 %v634, %v632
        %v677 = vpack.c.bf16 %v637, %v635
        %v678 = vpack.c.bf16 %v638, %v636
        %v679 = vpack.c.bf16 %v641, %v639
        %v680 = vpack.c.bf16 %v642, %v640
        %v681 = vpack.c.bf16 %v645, %v643
        %v682 = vpack.c.bf16 %v646, %v644
        %v683 = vpack.c.bf16 %v649, %v647
        %v684 = vpack.c.bf16 %v650, %v648
        %v685 = vpack.c.bf16 %v653, %v651
        %v686 = vpack.c.bf16 %v654, %v652
        %v687 = vld [vmem:[%s4] sm:$0xff]
        %v688 = vld [vmem:[%s4 + $0x8] sm:$0xff]
        %v689 = vld [vmem:[%s4 + $0x10] sm:$0xff]
        %v690 = vld [vmem:[%s4 + $0x18] sm:$0xff]
        %v691 = vld [vmem:[%s4 + $0x20] sm:$0xff]
        %v692 = vld [vmem:[%s4 + $0x28] sm:$0xff]
        %v693 = vld [vmem:[%s4 + $0x30] sm:$0xff]
        %v694 = vld [vmem:[%s4 + $0x38] sm:$0xff]
        %v695 = vld [vmem:[%s4 + $0x40] sm:$0xff]
        %v696 = vld [vmem:[%s4 + $0x48] sm:$0xff]
        %v697 = vld [vmem:[%s4 + $0x50] sm:$0xff]
        %v698 = vld [vmem:[%s4 + $0x58] sm:$0xff]
        %v699 = vld [vmem:[%s4 + $0x60] sm:$0xff]
        %v700 = vld [vmem:[%s4 + $0x68] sm:$0xff]
        %v701 = vld [vmem:[%s4 + $0x70] sm:$0xff]
        %v702 = vld [vmem:[%s4 + $0x78] sm:$0xff]
        %704 = vset.pattern.permute.xlu0 0
        %705 = vperm.xlu0 %704, %v687
        %v706 = vpop.permute.xlu0 %705
        %709 = vset.pattern.permute.xlu0 0
        %710 = vperm.xlu0 %709, %v688
        %v711 = vpop.permute.xlu0 %710
        %714 = vset.pattern.permute.xlu0 0
        %715 = vperm.xlu0 %714, %v689
        %v716 = vpop.permute.xlu0 %715
        %719 = vset.pattern.permute.xlu0 0
        %720 = vperm.xlu0 %719, %v690
        %v721 = vpop.permute.xlu0 %720
        %724 = vset.pattern.permute.xlu0 0
        %725 = vperm.xlu0 %724, %v691
        %v726 = vpop.permute.xlu0 %725
        %729 = vset.pattern.permute.xlu0 0
        %730 = vperm.xlu0 %729, %v692
        %v731 = vpop.permute.xlu0 %730
        %734 = vset.pattern.permute.xlu0 0
        %735 = vperm.xlu0 %734, %v693
        %v736 = vpop.permute.xlu0 %735
        %739 = vset.pattern.permute.xlu0 0
        %740 = vperm.xlu0 %739, %v694
        %v741 = vpop.permute.xlu0 %740
        %744 = vset.pattern.permute.xlu0 0
        %745 = vperm.xlu0 %744, %v695
        %v746 = vpop.permute.xlu0 %745
        %749 = vset.pattern.permute.xlu0 0
        %750 = vperm.xlu0 %749, %v696
        %v751 = vpop.permute.xlu0 %750
        %754 = vset.pattern.permute.xlu0 0
        %755 = vperm.xlu0 %754, %v697
        %v756 = vpop.permute.xlu0 %755
        %759 = vset.pattern.permute.xlu0 0
        %760 = vperm.xlu0 %759, %v698
        %v761 = vpop.permute.xlu0 %760
        %764 = vset.pattern.permute.xlu0 0
        %765 = vperm.xlu0 %764, %v699
        %v766 = vpop.permute.xlu0 %765
        %769 = vset.pattern.permute.xlu0 0
        %770 = vperm.xlu0 %769, %v700
        %v771 = vpop.permute.xlu0 %770
        %774 = vset.pattern.permute.xlu0 0
        %775 = vperm.xlu0 %774, %v701
        %v776 = vpop.permute.xlu0 %775
        %779 = vset.pattern.permute.xlu0 0
        %780 = vperm.xlu0 %779, %v702
        %v781 = vpop.permute.xlu0 %780
        %v799 = vunpack.c.l.b16 %v655
        %v800 = vunpack.c.l.b16 %v656
        %v801 = vunpack.c.l.b16 %v657
        %v802 = vunpack.c.l.b16 %v658
        %v803 = vunpack.c.l.b16 %v659
        %v804 = vunpack.c.l.b16 %v660
        %v805 = vunpack.c.l.b16 %v661
        %v806 = vunpack.c.l.b16 %v662
        %v807 = vunpack.c.l.b16 %v663
        %v808 = vunpack.c.l.b16 %v664
        %v809 = vunpack.c.l.b16 %v665
        %v810 = vunpack.c.l.b16 %v666
        %v811 = vunpack.c.l.b16 %v667
        %v812 = vunpack.c.l.b16 %v668
        %v813 = vunpack.c.l.b16 %v669
        %v814 = vunpack.c.l.b16 %v670
        %v815 = vpack.c.b16 %v800, %v799
        %v816 = vpack.c.b16 %v802, %v801
        %v817 = vpack.c.b16 %v804, %v803
        %v818 = vpack.c.b16 %v806, %v805
        %v819 = vpack.c.b16 %v808, %v807
        %v820 = vpack.c.b16 %v810, %v809
        %v821 = vpack.c.b16 %v812, %v811
        %v822 = vpack.c.b16 %v814, %v813
        %831 = vmatprep.subr.bf16.mxu0 %v672
        %832 = vmatpush1.bf16.msra.mxu0 %v671
        %833 = vmatprep.subr.bf16.mxu0 %v674
        %834 = vmatpush1.bf16.msra.mxu0 %v673
        %835 = vmatprep.subr.bf16.mxu0 %v676
        %836 = vmatpush1.bf16.msra.mxu0 %v675
        %837 = vmatprep.subr.bf16.mxu0 %v678
        %838 = vmatpush1.bf16.msra.mxu0 %v677
        %839 = vmatprep.subr.bf16.mxu0 %v680
        %840 = vmatpush1.bf16.msra.mxu0 %v679
        %841 = vmatprep.subr.bf16.mxu0 %v682
        %842 = vmatpush1.bf16.msra.mxu0 %v681
        %843 = vmatprep.subr.bf16.mxu0 %v684
        %844 = vmatpush1.bf16.msra.mxu0 %v683
        %845 = vmatprep.subr.bf16.mxu0 %v686
        %846 = vmatpush1.bf16.msra.mxu0 %v685
        %847 = vmatprep.subr.bf16.mxu0 0
        %848 = vmatpush1.bf16.msra.mxu0 0
        %849 = vmatprep.subr.bf16.mxu0 0
        %850 = vmatpush1.bf16.msra.mxu0 0
        %851 = vmatprep.subr.bf16.mxu0 0
        %852 = vmatpush1.bf16.msra.mxu0 0
        %853 = vmatprep.subr.bf16.mxu0 0
        %854 = vmatpush1.bf16.msra.mxu0 0
        %855 = vmatprep.subr.bf16.mxu0 0
        %856 = vmatpush1.bf16.msra.mxu0 0
        %857 = vmatprep.subr.bf16.mxu0 0
        %858 = vmatpush1.bf16.msra.mxu0 0
        %859 = vmatprep.subr.bf16.mxu0 0
        %860 = vmatpush1.bf16.msra.mxu0 0
        %861 = vmatprep.subr.bf16.mxu0 0
        %862 = vmatpush1.bf16.msra.mxu0 0
        %863 = vmatprep.mubr.bf16.mxu0 0
        %864 = vmatmul.mubr.bf16.gmra.mrb[0].mxu0 %v815
        %v865 = vpop.f32.mrb[0].mxu0
        %v866 = vadd.f32 %v706, %v865
        %v867 = vpop.f32.mrb[0].mxu0
        %v868 = vadd.f32 %v706, %v867
        %v869 = vpop.f32.mrb[0].mxu0
        %v870 = vadd.f32 %v711, %v869
        %v871 = vpop.f32.mrb[0].mxu0
        %v872 = vadd.f32 %v711, %v871
        %873 = vmatprep.mubr.bf16.mxu0 0
        %874 = vmatmul.mubr.bf16.gmra.mrb[0].mxu0 %v816
        %v875 = vpop.f32.mrb[0].mxu0
        %v876 = vadd.f32 %v716, %v875
        %v877 = vpop.f32.mrb[0].mxu0
        %v878 = vadd.f32 %v716, %v877
        %v879 = vpop.f32.mrb[0].mxu0
        %v880 = vadd.f32 %v721, %v879
        %v881 = vpop.f32.mrb[0].mxu0
        %v882 = vadd.f32 %v721, %v881
        %883 = vmatprep.mubr.bf16.mxu0 0
        %884 = vmatmul.mubr.bf16.gmra.mrb[0].mxu0 %v817
        %v885 = vpop.f32.mrb[0].mxu0
        %v886 = vadd.f32 %v726, %v885
        %v887 = vpop.f32.mrb[0].mxu0
        %v888 = vadd.f32 %v726, %v887
        %v889 = vpop.f32.mrb[0].mxu0
        %v890 = vadd.f32 %v731, %v889
        %v891 = vpop.f32.mrb[0].mxu0
        %v892 = vadd.f32 %v731, %v891
        %893 = vmatprep.mubr.bf16.mxu0 0
        %894 = vmatmul.mubr.bf16.gmra.mrb[0].mxu0 %v818
        %v895 = vpop.f32.mrb[0].mxu0
        %v896 = vadd.f32 %v736, %v895
        %v897 = vpop.f32.mrb[0].mxu0
        %v898 = vadd.f32 %v736, %v897
        %v899 = vpop.f32.mrb[0].mxu0
        %v900 = vadd.f32 %v741, %v899
        %v901 = vpop.f32.mrb[0].mxu0
        %v902 = vadd.f32 %v741, %v901
        %903 = vmatprep.mubr.bf16.mxu0 0
        %904 = vmatmul.mubr.bf16.gmra.mrb[0].mxu0 %v819
        %v905 = vpop.f32.mrb[0].mxu0
        %v906 = vadd.f32 %v746, %v905
        %v907 = vpop.f32.mrb[0].mxu0
        %v908 = vadd.f32 %v746, %v907
        %v909 = vpop.f32.mrb[0].mxu0
        %v910 = vadd.f32 %v751, %v909
        %v911 = vpop.f32.mrb[0].mxu0
        %v912 = vadd.f32 %v751, %v911
        %913 = vmatprep.mubr.bf16.mxu0 0
        %914 = vmatmul.mubr.bf16.gmra.mrb[0].mxu0 %v820
        %v915 = vpop.f32.mrb[0].mxu0
        %v916 = vadd.f32 %v756, %v915
        %v917 = vpop.f32.mrb[0].mxu0
        %v918 = vadd.f32 %v756, %v917
        %v919 = vpop.f32.mrb[0].mxu0
        %v920 = vadd.f32 %v761, %v919
        %v921 = vpop.f32.mrb[0].mxu0
        %v922 = vadd.f32 %v761, %v921
        %923 = vmatprep.mubr.bf16.mxu0 0
        %924 = vmatmul.mubr.bf16.gmra.mrb[0].mxu0 %v821
        %v925 = vpop.f32.mrb[0].mxu0
        %v926 = vadd.f32 %v766, %v925
        %v927 = vpop.f32.mrb[0].mxu0
        %v928 = vadd.f32 %v766, %v927
        %v929 = vpop.f32.mrb[0].mxu0
        %v930 = vadd.f32 %v771, %v929
        %v931 = vpop.f32.mrb[0].mxu0
        %v932 = vadd.f32 %v771, %v931
        %933 = vmatprep.mubr.bf16.mxu0 0
        %934 = vmatmul.mubr.bf16.gmra.mrb[0].mxu0 %v822
        %v935 = vpop.f32.mrb[0].mxu0
        %v936 = vadd.f32 %v776, %v935
        %v937 = vpop.f32.mrb[0].mxu0
        %v938 = vadd.f32 %v776, %v937
        %v939 = vpop.f32.mrb[0].mxu0
        %v940 = vadd.f32 %v781, %v939
        %v941 = vpop.f32.mrb[0].mxu0
        %v942 = vadd.f32 %v781, %v941
        %943 = vdwg.mxu0
        %v944 = vmax.f32 %v866, 0.0
        %v945 = vmax.f32 %v868, 0.0
        %v946 = vmax.f32 %v870, 0.0
        %v947 = vmax.f32 %v872, 0.0
        %v948 = vmax.f32 %v876, 0.0
        %v949 = vmax.f32 %v878, 0.0
        %v950 = vmax.f32 %v880, 0.0
        %v951 = vmax.f32 %v882, 0.0
        %v952 = vmax.f32 %v886, 0.0
        %v953 = vmax.f32 %v888, 0.0
        %v954 = vmax.f32 %v890, 0.0
        %v955 = vmax.f32 %v892, 0.0
        %v956 = vmax.f32 %v896, 0.0
        %v957 = vmax.f32 %v898, 0.0
        %v958 = vmax.f32 %v900, 0.0
        %v959 = vmax.f32 %v902, 0.0
        %v960 = vmax.f32 %v906, 0.0
        %v961 = vmax.f32 %v908, 0.0
        %v962 = vmax.f32 %v910, 0.0
        %v963 = vmax.f32 %v912, 0.0
        %v964 = vmax.f32 %v916, 0.0
        %v965 = vmax.f32 %v918, 0.0
        %v966 = vmax.f32 %v920, 0.0
        %v967 = vmax.f32 %v922, 0.0
        %v968 = vmax.f32 %v926, 0.0
        %v969 = vmax.f32 %v928, 0.0
        %v970 = vmax.f32 %v930, 0.0
        %v971 = vmax.f32 %v932, 0.0
        %v972 = vmax.f32 %v936, 0.0
        %v973 = vmax.f32 %v938, 0.0
        %v974 = vmax.f32 %v940, 0.0
        %v975 = vmax.f32 %v942, 0.0
        %v976 = vld [vmem:[%s5] sm:$0xff]
        %v977 = vld [vmem:[%s5 + $0x8] sm:$0xff]
        %v978 = vld [vmem:[%s5 + $0x10] sm:$0xff]
        %v979 = vld [vmem:[%s5 + $0x18] sm:$0xff]
        %v980 = vld [vmem:[%s5 + $0x20] sm:$0xff]
        %v981 = vld [vmem:[%s5 + $0x28] sm:$0xff]
        %v982 = vld [vmem:[%s5 + $0x30] sm:$0xff]
        %v983 = vld [vmem:[%s5 + $0x38] sm:$0xff]
        %v984 = vld [vmem:[%s5 + $0x40] sm:$0xff]
        %v985 = vld [vmem:[%s5 + $0x48] sm:$0xff]
        %v986 = vld [vmem:[%s5 + $0x50] sm:$0xff]
        %v987 = vld [vmem:[%s5 + $0x58] sm:$0xff]
        %v988 = vld [vmem:[%s5 + $0x60] sm:$0xff]
        %v989 = vld [vmem:[%s5 + $0x68] sm:$0xff]
        %v990 = vld [vmem:[%s5 + $0x70] sm:$0xff]
        %v991 = vld [vmem:[%s5 + $0x78] sm:$0xff]
        %993 = vset.pattern.permute.xlu0 0
        %994 = vperm.xlu0 %993, %v976
        %v995 = vpop.permute.xlu0 %994
        %998 = vset.pattern.permute.xlu0 0
        %999 = vperm.xlu0 %998, %v977
        %v1000 = vpop.permute.xlu0 %999
        %1003 = vset.pattern.permute.xlu0 0
        %1004 = vperm.xlu0 %1003, %v978
        %v1005 = vpop.permute.xlu0 %1004
        %1008 = vset.pattern.permute.xlu0 0
        %1009 = vperm.xlu0 %1008, %v979
        %v1010 = vpop.permute.xlu0 %1009
        %1013 = vset.pattern.permute.xlu0 0
        %1014 = vperm.xlu0 %1013, %v980
        %v1015 = vpop.permute.xlu0 %1014
        %1018 = vset.pattern.permute.xlu0 0
        %1019 = vperm.xlu0 %1018, %v981
        %v1020 = vpop.permute.xlu0 %1019
        %1023 = vset.pattern.permute.xlu0 0
        %1024 = vperm.xlu0 %1023, %v982
        %v1025 = vpop.permute.xlu0 %1024
        %1028 = vset.pattern.permute.xlu0 0
        %1029 = vperm.xlu0 %1028, %v983
        %v1030 = vpop.permute.xlu0 %1029
        %1033 = vset.pattern.permute.xlu0 0
        %1034 = vperm.xlu0 %1033, %v984
        %v1035 = vpop.permute.xlu0 %1034
        %1038 = vset.pattern.permute.xlu0 0
        %1039 = vperm.xlu0 %1038, %v985
        %v1040 = vpop.permute.xlu0 %1039
        %1043 = vset.pattern.permute.xlu0 0
        %1044 = vperm.xlu0 %1043, %v986
        %v1045 = vpop.permute.xlu0 %1044
        %1048 = vset.pattern.permute.xlu0 0
        %1049 = vperm.xlu0 %1048, %v987
        %v1050 = vpop.permute.xlu0 %1049
        %1053 = vset.pattern.permute.xlu0 0
        %1054 = vperm.xlu0 %1053, %v988
        %v1055 = vpop.permute.xlu0 %1054
        %1058 = vset.pattern.permute.xlu0 0
        %1059 = vperm.xlu0 %1058, %v989
        %v1060 = vpop.permute.xlu0 %1059
        %1063 = vset.pattern.permute.xlu0 0
        %1064 = vperm.xlu0 %1063, %v990
        %v1065 = vpop.permute.xlu0 %1064
        %1068 = vset.pattern.permute.xlu0 0
        %1069 = vperm.xlu0 %1068, %v991
        %v1070 = vpop.permute.xlu0 %1069
        %v1072 = vmul.f32 %v944, %v995
        %v1073 = vmul.f32 %v945, %v995
        %v1074 = vmul.f32 %v946, %v1000
        %v1075 = vmul.f32 %v947, %v1000
        %v1076 = vmul.f32 %v948, %v1005
        %v1077 = vmul.f32 %v949, %v1005
        %v1078 = vmul.f32 %v950, %v1010
        %v1079 = vmul.f32 %v951, %v1010
        %v1080 = vmul.f32 %v952, %v1015
        %v1081 = vmul.f32 %v953, %v1015
        %v1082 = vmul.f32 %v954, %v1020
        %v1083 = vmul.f32 %v955, %v1020
        %v1084 = vmul.f32 %v956, %v1025
        %v1085 = vmul.f32 %v957, %v1025
        %v1086 = vmul.f32 %v958, %v1030
        %v1087 = vmul.f32 %v959, %v1030
        %v1088 = vmul.f32 %v960, %v1035
        %v1089 = vmul.f32 %v961, %v1035
        %v1090 = vmul.f32 %v962, %v1040
        %v1091 = vmul.f32 %v963, %v1040
        %v1092 = vmul.f32 %v964, %v1045
        %v1093 = vmul.f32 %v965, %v1045
        %v1094 = vmul.f32 %v966, %v1050
        %v1095 = vmul.f32 %v967, %v1050
        %v1096 = vmul.f32 %v968, %v1055
        %v1097 = vmul.f32 %v969, %v1055
        %v1098 = vmul.f32 %v970, %v1060
        %v1099 = vmul.f32 %v971, %v1060
        %v1100 = vmul.f32 %v972, %v1065
        %v1101 = vmul.f32 %v973, %v1065
        %v1102 = vmul.f32 %v974, %v1070
        %v1103 = vmul.f32 %v975, %v1070
        %v1104 = vadd.f32 %v1072, %v1074
        %v1105 = vadd.f32 %v1104, %v1076
        %v1106 = vadd.f32 %v1105, %v1078
        %v1107 = vadd.f32 %v1106, %v1080
        %v1108 = vadd.f32 %v1107, %v1082
        %v1109 = vadd.f32 %v1108, %v1084
        %v1110 = vadd.f32 %v1109, %v1086
        %v1111 = vadd.f32 %v1110, %v1088
        %v1112 = vadd.f32 %v1111, %v1090
        %v1113 = vadd.f32 %v1112, %v1092
        %v1114 = vadd.f32 %v1113, %v1094
        %v1115 = vadd.f32 %v1114, %v1096
        %v1116 = vadd.f32 %v1115, %v1098
        %v1117 = vadd.f32 %v1116, %v1100
        %v1118 = vadd.f32 %v1117, %v1102
        %v1119 = vrot.slane %v1118, 4
        %v1120 = vadd.f32 %v1118, %v1119
        %v1121 = vrot.slane %v1120, 2
        %v1122 = vadd.f32 %v1120, %v1121
        %v1123 = vrot.slane %v1122, 1
        %v1124 = vadd.f32 %v1122, %v1123
        %v1125 = vadd.f32 %v1073, %v1075
        %v1126 = vadd.f32 %v1125, %v1077
        %v1127 = vadd.f32 %v1126, %v1079
        %v1128 = vadd.f32 %v1127, %v1081
        %v1129 = vadd.f32 %v1128, %v1083
        %v1130 = vadd.f32 %v1129, %v1085
        %v1131 = vadd.f32 %v1130, %v1087
        %v1132 = vadd.f32 %v1131, %v1089
        %v1133 = vadd.f32 %v1132, %v1091
        %v1134 = vadd.f32 %v1133, %v1093
        %v1135 = vadd.f32 %v1134, %v1095
        %v1136 = vadd.f32 %v1135, %v1097
        %v1137 = vadd.f32 %v1136, %v1099
        %v1138 = vadd.f32 %v1137, %v1101
        %v1139 = vadd.f32 %v1138, %v1103
        %v1140 = vrot.slane %v1139, 4
        %v1141 = vadd.f32 %v1139, %v1140
        %v1142 = vrot.slane %v1141, 2
        %v1143 = vadd.f32 %v1141, %v1142
        %v1144 = vrot.slane %v1143, 1
        %v1145 = vadd.f32 %v1143, %v1144
        %v1146 = vld [vmem:[#allocation2] sm:$0x1]
        %1148 = vset.pattern.permute.xlu0 0
        %1149 = vperm.xlu0 %1148, %v1146
        %v1150 = vpop.permute.xlu0 %1149
        %v1152 = vlaneseq
        %v1153 = vshrl.u32 %v1152, 7
        %v1154 = vsub.s32 0, %v1153
        %v1155 = vrot.slane %v1150, %v1154
        %v1156 = vadd.f32 %v1124, %v1155
        %v1157 = vadd.f32 %v1145, %v1155
        %v1160 = vcombine.low %v1156, %v1157
        %v1162 = vunpack.c.l.s4 1966171168
        %v1163 = vunpack.c.0.s8 %v1162
        %v1164 = vlaneseq
        %v1165 = vshrl.u32 %v1164, 7
        %v1166 = vsub.s32 %v1163, %v1165
        %v1167 = vrot.slane %v1160, %v1166
        %v1169 = vunpack.c.l.s4 1966171168
        %v1170 = vunpack.c.0.s8 %v1169
        %v1171 = vlaneseq
        %v1172 = vshrl.u32 %v1171, 7
        %v1173 = vsub.s32 %v1170, %v1172
        %v1174 = vrot.slane %v1167, %v1173
        %v1176 = vlaneseq
        %vm1177 = vcmp.ge.s32.totalorder %v1176, 0
        %vm1178 = vcmp.lt.s32.totalorder %v1176, 256
        %vm1179 = vmand %vm1177, %vm1178
        %1180 = vst.msk [vmem:[%s317] sm:$0x3] %vm1179, %v1174
        %s1181 = sand.u32 %s183, 1
        %s1182 = scalar_lea.sflag [#allocation5], %s1181
        %s1183 = sand.u32 %s183, 1
        %s1184 = smul.addr %s1183, 2
        %s1185 = scalar_lea.vmem [#allocation4], %s1184
        // Predicated region
        $region87: #{sepsis_forward.1} parent=81 // pred_check
          %p1186 = pneg %p193
        $region88: #{sepsis_forward.1} parent=81 // pred_check_branch
          %1188 = sbr.rel (%p1186) target = $region90
        $region89: #{sepsis_forward.1} parent=81 // pred_region
          %s1189 = smul.u32 2, %s23
          %s1191 = ssub.s32 32, 32
          %1192 = vsyncadd %s1182, %s1191
          %s1193 = smul.addr %s1189, 16
          %s1194 = scalar_lea.hbm %s7, %s1193
          %s1196 = sshll.u32 %s1185, 4
          %s1197 = int_to_ptr.vmem [resolvable:$true] %s1196
          %1199 = dma.vmem_to_hbm [thread:$0]  %s1197, 32, %s1194, %s1182
        $region90: #{sepsis_forward.1} parent=81 // pred_fallthru
          _
      $region82: #{sepsis_forward.1} parent=5 // pred_fallthru
        _
      %p1200 = scmp.le.s32.totalorder 2, %s18
      // Predicated region
      $region91: #{sepsis_forward.1} parent=5 // pred_check
        %p1201 = pneg %p1200
      $region92: #{sepsis_forward.1} parent=5 // pred_check_branch
        %1203 = sbr.rel (%p1201) target = $region94
      $region93: #{sepsis_forward.1} parent=5 // pred_region
        %s1204 = ssub.s32 %s18, 2
        // Predicated region
        $region95: #{sepsis_forward.1} parent=93 // pred_check
          %p1205 = pneg %p199
        $region96: #{sepsis_forward.1} parent=93 // pred_check_branch
          %1207 = sbr.rel (%p1205) target = $region98
        $region97: #{sepsis_forward.1} parent=93 // pred_region
          %s1208 = sand.u32 %s184, 1
          %s1209 = scalar_lea.sflag [#allocation5], %s1208
          %s1210 = sand.u32 %s184, 1
          %s1211 = smul.addr %s1210, 2
          %s1212 = scalar_lea.vmem [#allocation4], %s1211
          %1213 = dma.done %s1209, 32
        $region98: #{sepsis_forward.1} parent=93 // pred_fallthru
          _
      $region94: #{sepsis_forward.1} parent=5 // pred_fallthru
        _
    $region6: #{sepsis_forward.1} parent=1 // loop_footer
      %s22 = sadd.s32 1, %s18
    $region7: #{sepsis_forward.1} parent=1 // loop_footer_branch
      %17 = sbr.rel target = $region3
    $region8: #{sepsis_forward.1} parent=1 // loop_exit
      _
    %1214 = vsyncpa [#allocation5], 1
    %s1215 = scalar_lea.sflag [#allocation5], 1
    %1216 = vsyncpa %s1215, 1

</llo_original>
